<compile_context>
chip_gen: v5e
topology: v5e:2x2
jax: 0.10.0
libtpu: 0.0.40
codegen_flags: <defaults>
</compile_context>

<pallas_src>
import functools

import jax
import jax.numpy as jnp
from jax.experimental import pallas as pl
from jax.experimental.pallas import tpu as pltpu

_LANES = 128
_SUBLANES = 8
_MAX_TILE_ROWS = 2048   # (2048, 128) f32 block = 1 MiB per input
_NUM_SPLITS = 2         # megacore split (v7x); harmless serial outer loop on v5e/v6e


def _charbonnier_kernel(x_ref, y_ref, o_ref, *, eps, tile_rows, blocks_per_split,
                        n_full_rows, rem):
    c = pl.program_id(0)   # core split ("parallel")
    i = pl.program_id(1)   # row-block index within the split ("arbitrary")

    @pl.when(i == 0)
    def _():
        o_ref[...] = jnp.zeros_like(o_ref)

    x = x_ref[...].astype(jnp.float32)
    y = y_ref[...].astype(jnp.float32)
    d = x - y
    val = jnp.sqrt(d * d + jnp.float32(eps * eps))

    # Mask out rows/lanes that fall past the true element count (padded tail,
    # partial boundary blocks, or fully out-of-range blocks of the second split).
    block_idx = c * blocks_per_split + i
    row_in_block = jax.lax.broadcasted_iota(jnp.int32, (tile_rows, _LANES), 0)
    col = jax.lax.broadcasted_iota(jnp.int32, (tile_rows, _LANES), 1)
    global_row = block_idx * tile_rows + row_in_block
    mask = (global_row < n_full_rows) | ((global_row == n_full_rows) & (col < rem))
    val = jnp.where(mask, val, jnp.float32(0.0))

    # VPU-only reduce of (tile_rows, 128) -> (8, 128); accumulate into the resident
    # vreg-shaped output block. The single cross-lane reduce happens in the wrapper.
    o_ref[...] += val.reshape(tile_rows // _SUBLANES, _SUBLANES, _LANES).sum(axis=0)


def charbonnier_loss(output, gt, epsilon=0.001):
    assert output.shape == gt.shape
    n_valid = output.size

    x = output.reshape(-1)   # keep native dtype; cast to f32 inside the kernel
    y = gt.reshape(-1)

    # Only pad a (rare) ragged tail up to a multiple of 128 lanes, and very small
    # inputs up to one (8,128) tile. Padded elements are masked in the kernel.
    padded_n = max(_SUBLANES * _LANES, pl.cdiv(n_valid, _LANES) * _LANES)
    if padded_n != n_valid:
        x = jnp.pad(x, (0, padded_n - n_valid))
        y = jnp.pad(y, (0, padded_n - n_valid))

    rows = padded_n // _LANES
    x2 = x.reshape(rows, _LANES)
    y2 = y.reshape(rows, _LANES)

    # Block rows: multiple of 8, never larger than the array, capped at ~1 MiB.
    tile_rows = min(_MAX_TILE_ROWS, (rows // _SUBLANES) * _SUBLANES)
    row_blocks = pl.cdiv(rows, tile_rows)
    blocks_per_split = pl.cdiv(row_blocks, _NUM_SPLITS)
    grid = (_NUM_SPLITS, blocks_per_split)

    n_full_rows = n_valid // _LANES
    rem = n_valid % _LANES

    kernel = functools.partial(
        _charbonnier_kernel,
        eps=float(epsilon),
        tile_rows=tile_rows,
        blocks_per_split=blocks_per_split,
        n_full_rows=n_full_rows,
        rem=rem,
    )

    def in_map(c, i):
        # Clamp so the DMA stays in bounds; out-of-range iterations are fully
        # masked inside the kernel and contribute exactly zero.
        return (jnp.minimum(c * blocks_per_split + i, row_blocks - 1), 0)

    partials = pl.pallas_call(
        kernel,
        out_shape=jax.ShapeDtypeStruct((_NUM_SPLITS, _SUBLANES, _LANES), jnp.float32),
        grid_spec=pltpu.PrefetchScalarGridSpec(
            num_scalar_prefetch=0,
            grid=grid,
            in_specs=[
                pl.BlockSpec((tile_rows, _LANES), in_map),
                pl.BlockSpec((tile_rows, _LANES), in_map),
            ],
            out_specs=pl.BlockSpec((None, _SUBLANES, _LANES), lambda c, i: (c, 0, 0)),
        ),
        compiler_params=pltpu.CompilerParams(
            dimension_semantics=("parallel", "arbitrary"),
        ),
    )(x2, y2)

    # Tiny final reduce (2*8*128 partial sums) + mean, outside the kernel.
    return jnp.sum(partials) / jnp.float32(n_valid)


if __name__ == "__main__":
    key = jax.random.PRNGKey(0)
    k1, k2 = jax.random.split(key)
    # NCHW-shaped inputs like the PyTorch module would see (batch=2, channels=4, 16x16).
    output = jax.random.normal(k1, (2, 4, 16, 16), dtype=jnp.float32)
    gt = jax.random.normal(k2, (2, 4, 16, 16), dtype=jnp.float32)

    loss = charbonnier_loss(output, gt, epsilon=0.001)
    jax.block_until_ready(loss)

    # Reference check (plain JAX) for sanity.
    ref = jnp.mean(jnp.sqrt((output - gt) ** 2 + 0.001 ** 2))
    assert jnp.allclose(loss, ref, rtol=1e-5, atol=1e-6), (loss, ref)

    print("KERNEL_OK")
</pallas_src>

<mosaic_0001>
module attributes {stable_mosaic.version = 11 : i64} {
  func.func @_charbonnier_kernel(%arg0: i32, %arg1: i32, %arg2: memref<16x128xf32, #tpu.memory_space<vmem>>, %arg3: memref<16x128xf32, #tpu.memory_space<vmem>>, %arg4: memref<1x8x128xf32, #tpu.memory_space<vmem>>) attributes {dimension_semantics = [#tpu.dimension_semantics<parallel>, #tpu.dimension_semantics<arbitrary>], iteration_bounds = array<i64: 2, 1>, scalar_prefetch = 0 : i64, scratch_operands = 0 : i64, tpu.core_type = #tpu.core_type<tc>, window_params = [{transform_indices = @transform_0, window_bounds = array<i64: 16, 128>}, {transform_indices = @transform_1, window_bounds = array<i64: 16, 128>}, {transform_indices = @transform_2, window_bounds = array<i64: 1, 8, 128>}]} {
    %c0_i32 = arith.constant 0 : i32
    %0 = arith.cmpi eq, %arg1, %c0_i32 : i32
    %1 = arith.extui %0 : i1 to i32
    %c0_i32_0 = arith.constant 0 : i32
    %2 = arith.cmpi ne, %1, %c0_i32_0 : i32
    scf.if %2 {
      %cst_15 = arith.constant 0.000000e+00 : f32
      %35 = vector.broadcast %cst_15 : f32 to vector<8x128xf32>
      %c0_16 = arith.constant 0 : index
      %c0_17 = arith.constant 0 : index
      %c0_18 = arith.constant 0 : index
      %36 = vector.load %arg4[%c0_16, %c0_17, %c0_18] : memref<1x8x128xf32, #tpu.memory_space<vmem>>, vector<1x8x128xf32>
      %37 = vector.shape_cast %36 : vector<1x8x128xf32> to vector<8x128xf32>
      %38 = vector.shape_cast %35 : vector<8x128xf32> to vector<1x8x128xf32>
      tpu.vector_store %arg4[%c0_16, %c0_17, %c0_18], %38 {strides = array<i32>} : memref<1x8x128xf32, #tpu.memory_space<vmem>>, vector<1x8x128xf32>,
    } else {
    }
    %c0 = arith.constant 0 : index
    %c0_1 = arith.constant 0 : index
    %3 = vector.load %arg2[%c0, %c0_1] : memref<16x128xf32, #tpu.memory_space<vmem>>, vector<16x128xf32>
    %c0_2 = arith.constant 0 : index
    %c0_3 = arith.constant 0 : index
    %4 = vector.load %arg3[%c0_2, %c0_3] : memref<16x128xf32, #tpu.memory_space<vmem>>, vector<16x128xf32>
    %5 = arith.subf %3, %4 : vector<16x128xf32>
    %6 = arith.mulf %5, %5 : vector<16x128xf32>
    %cst = arith.constant 9.99999997E-7 : f32
    %7 = vector.broadcast %cst : f32 to vector<16x128xf32>
    %8 = arith.addf %6, %7 : vector<16x128xf32>
    %9 = math.sqrt %8 : vector<16x128xf32>
    %c1_i32 = arith.constant 1 : i32
    %10 = arith.muli %arg0, %c1_i32 : i32
    %11 = arith.addi %10, %arg1 : i32
    %12 = tpu.iota {dimensions = array<i32: 0>} : vector<16x128xi32>
    %13 = tpu.iota {dimensions = array<i32: 1>} : vector<16x128xi32>
    %c16_i32 = arith.constant 16 : i32
    %14 = arith.muli %11, %c16_i32 : i32
    %15 = vector.broadcast %14 : i32 to vector<16x128xi32>
    %16 = arith.addi %15, %12 : vector<16x128xi32>
    %c16_i32_4 = arith.constant 16 : i32
    %17 = vector.broadcast %c16_i32_4 : i32 to vector<16x128xi32>
    %18 = arith.cmpi slt, %16, %17 : vector<16x128xi32>
    %c16_i32_5 = arith.constant 16 : i32
    %19 = vector.broadcast %c16_i32_5 : i32 to vector<16x128xi32>
    %20 = arith.cmpi eq, %16, %19 : vector<16x128xi32>
    %c0_i32_6 = arith.constant 0 : i32
    %21 = vector.broadcast %c0_i32_6 : i32 to vector<16x128xi32>
    %22 = arith.cmpi slt, %13, %21 : vector<16x128xi32>
    %23 = arith.andi %20, %22 : vector<16x128xi1>
    %24 = arith.ori %18, %23 : vector<16x128xi1>
    %cst_7 = arith.constant 0.000000e+00 : f32
    %25 = vector.broadcast %cst_7 : f32 to vector<16x128xf32>
    %26 = arith.select %24, %9, %25 : vector<16x128xi1>, vector<16x128xf32>
    %c0_8 = arith.constant 0 : index
    %c0_9 = arith.constant 0 : index
    %c0_10 = arith.constant 0 : index
    %27 = vector.load %arg4[%c0_8, %c0_9, %c0_10] : memref<1x8x128xf32, #tpu.memory_space<vmem>>, vector<1x8x128xf32>
    %28 = vector.shape_cast %27 : vector<1x8x128xf32> to vector<8x128xf32>
    %29 = vector.shape_cast %26 : vector<16x128xf32> to vector<2x8x128xf32>
    %cst_11 = arith.constant dense<0.000000e+00> : vector<8x128xf32>
    %30 = vector.multi_reduction <add>, %29, %cst_11 [0] : vector<2x8x128xf32> to vector<8x128xf32>
    %31 = arith.addf %28, %30 : vector<8x128xf32>
    %c0_12 = arith.constant 0 : index
    %c0_13 = arith.constant 0 : index
    %c0_14 = arith.constant 0 : index
    %32 = vector.load %arg4[%c0_12, %c0_13, %c0_14] : memref<1x8x128xf32, #tpu.memory_space<vmem>>, vector<1x8x128xf32>
    %33 = vector.shape_cast %32 : vector<1x8x128xf32> to vector<8x128xf32>
    %34 = vector.shape_cast %31 : vector<8x128xf32> to vector<1x8x128xf32>
    tpu.vector_store %arg4[%c0_12, %c0_13, %c0_14], %34 {strides = array<i32>} : memref<1x8x128xf32, #tpu.memory_space<vmem>>, vector<1x8x128xf32>,
    return
  }
  func.func @transform_0(%arg0: i32, %arg1: i32) -> (i32, i32) {
    %c1_i32 = arith.constant 1 : i32
    %0 = arith.muli %arg0, %c1_i32 : i32
    %1 = arith.addi %0, %arg1 : i32
    %c0_i32 = arith.constant 0 : i32
    %2 = arith.minsi %1, %c0_i32 : i32
    %c0_i32_0 = arith.constant 0 : i32
    %c0_i32_1 = arith.constant 0 : i32
    return %2, %c0_i32_0 : i32, i32
  }
  func.func @transform_1(%arg0: i32, %arg1: i32) -> (i32, i32) {
    %c1_i32 = arith.constant 1 : i32
    %0 = arith.muli %arg0, %c1_i32 : i32
    %1 = arith.addi %0, %arg1 : i32
    %c0_i32 = arith.constant 0 : i32
    %2 = arith.minsi %1, %c0_i32 : i32
    %c0_i32_0 = arith.constant 0 : i32
    %c0_i32_1 = arith.constant 0 : i32
    return %2, %c0_i32_0 : i32, i32
  }
  func.func @transform_2(%arg0: i32, %arg1: i32) -> (i32, i32, i32) {
    %c0_i32 = arith.constant 0 : i32
    %c0_i32_0 = arith.constant 0 : i32
    %c0_i32_1 = arith.constant 0 : i32
    return %arg0, %c0_i32, %c0_i32_0 : i32, i32, i32
  }
}

</mosaic_0001>

<llo_original>
// kernel: tpu_custom_call.1
$region0: #{tpu_custom_call.1}
  #allocation0 [shape = 'u32[]', space=smem, size = 0x4, offset = 0x4, fixed_abs, tag = 'smem constant byte address 0x4 - core index']
  #allocation1 [shape = 'u32[72,128]{1,0:T(1,128)}', space=vmem, size = 0x9000, scoped, tag = 'internal scratch']
  %s0 = inlined_call_operand.hbm [shape: f32[16,128], index: 0, kind: input, shape index: {}]
  %s1 = inlined_call_operand.hbm [shape: f32[16,128], index: 1, kind: input, shape index: {}]
  %s2 = inlined_call_operand.hbm [shape: f32[2,8,128], index: 2, kind: output, shape index: {}]
  %s3 = sld [smem:[#allocation0]]
  $region53: #{tpu_custom_call.1} parent=0
    _
  %s5 = ssub.s32 1, %s3
  %s6 = scalar_select 0, %s5, %s3
  $region1: #{tpu_custom_call.1} parent=0
    #allocation2 [shape = 'u8[16384]{0}', space=vmem, size = 0x4000, scoped, tag = 'input window, operand 0']
    #allocation3 [shape = 's32[2]{0}', space=sflag, size = 0x8, scoped, tag = 'scoped memory for tpu_custom_call.1']
    #allocation4 [shape = 's32[2]{0}', space=sflag, size = 0x8, scoped, tag = 'scoped memory for tpu_custom_call.1']
    #allocation5 [shape = 'u8[16384]{0}', space=vmem, size = 0x4000, scoped, tag = 'input window, operand 1']
    #allocation6 [shape = 's32[2]{0}', space=sflag, size = 0x8, scoped, tag = 'scoped memory for tpu_custom_call.1']
    #allocation7 [shape = 'u8[8192]{0}', space=vmem, size = 0x2000, scoped, tag = 'output window, operand 0']
    %7 = vsyncpa [#allocation3], 0
    %s8 = scalar_lea.sflag [#allocation3], 1
    %9 = vsyncpa %s8, 0
    %10 = vsyncpa [#allocation6], 0
    %s11 = scalar_lea.sflag [#allocation6], 1
    %12 = vsyncpa %s11, 0
    %13 = vsyncpa [#allocation4], 0
    %s14 = scalar_lea.sflag [#allocation4], 1
    %15 = vsyncpa %s14, 0
    loop: start=0, step=1, limit=4
    $region2: #{tpu_custom_call.1} parent=1 // loop_pre_header
      _
    $region3: #{tpu_custom_call.1} parent=1 // loop_header
      %s17 = sphi 0, %s21
      %p18 = scmp.ge.s32.totalorder %s17, 4
      %s24 = sphi 0, %s36
      %s25 = sphi 0, %s32
      %s26 = sphi 0, %s24
      %s27 = sphi 0, %s25
      %s28 = sphi 0, %s26
      %s29 = sphi 0, %s27
      %s45 = sphi 0, %s47
      %s48 = sphi 0, %s45
      %s49 = sphi 0, %s48
      %s65 = sphi 0, %s49
      %s77 = sphi 0, %s79
      %s80 = sphi 0, %s77
      %s81 = sphi 0, %s80
      %s97 = sphi 0, %s81
      %s103 = sphi 0, %s105
      %s106 = sphi 0, %s103
      %s107 = sphi 0, %s106
      %s123 = sphi 0, %s107
    $region4: #{tpu_custom_call.1} parent=1 // loop_header_branch
      %20 = sbr.rel (%p18) target = $region8
    $region5: #{tpu_custom_call.1} parent=1 // loop_body
      %s22 = ssub.s32 %s17, 1
      %s23 = ssub.s32 %s17, 2
      %s30 = sadd.s32 1, %s25
      %p31 = scmp.ge.s32.totalorder %s30, 1
      %s32 = scalar_select %p31, 0, %s30
      %s33 = sadd.s32 1, %s24
      %s34 = scalar_select %p31, %s33, %s24
      %p35 = scmp.ge.s32.totalorder %s34, 2
      %s36 = scalar_select %p35, 0, %s34
      %s37 = sadd.s32 %s24, %s25
      %p38 = scmp.lt.s32.totalorder %s37, 0
      %s39 = scalar_select %p38, %s37, 0
      %s40 = sadd.s32 %s36, %s32
      %p41 = scmp.lt.s32.totalorder %s40, 0
      %s42 = scalar_select %p41, %s40, 0
      %s43 = ssub.s32 %s39, %s42
      %p44 = scmp.eq.s32.totalorder %s43, 0
      %s46 = sadd.s32 %s45, 1
      %s47 = scalar_select %p44, %s45, %s46
      %p50 = pneg %p44
      %p51 = scmp.eq.s32.totalorder %s17, 1
      %p52 = por %p50, %p51
      %p53 = scmp.ne.s32.totalorder %s45, %s48
      %p54 = scmp.eq.s32.totalorder %s17, 0
      %p55 = por %p53, %p54
      %p56 = scmp.ne.s32.totalorder %s45, %s48
      %p57 = scmp.eq.s32.totalorder %s22, 1
      %p58 = por %p56, %p57
      %p59 = scmp.ne.s32.totalorder %s48, %s49
      %p60 = scmp.eq.s32.totalorder %s22, 0
      %p61 = por %p59, %p60
      %p62 = scmp.ne.s32.totalorder %s48, %s49
      %p63 = scmp.eq.s32.totalorder %s23, 1
      %p64 = por %p62, %p63
      %p66 = scmp.ne.s32.totalorder %s49, %s65
      %p67 = scmp.eq.s32.totalorder %s23, 0
      %p68 = por %p66, %p67
      %s69 = sadd.s32 %s24, %s25
      %p70 = scmp.lt.s32.totalorder %s69, 0
      %s71 = scalar_select %p70, %s69, 0
      %s72 = sadd.s32 %s36, %s32
      %p73 = scmp.lt.s32.totalorder %s72, 0
      %s74 = scalar_select %p73, %s72, 0
      %s75 = ssub.s32 %s71, %s74
      %p76 = scmp.eq.s32.totalorder %s75, 0
      %s78 = sadd.s32 %s77, 1
      %s79 = scalar_select %p76, %s77, %s78
      %p82 = pneg %p76
      %p83 = scmp.eq.s32.totalorder %s17, 1
      %p84 = por %p82, %p83
      %p85 = scmp.ne.s32.totalorder %s77, %s80
      %p86 = scmp.eq.s32.totalorder %s17, 0
      %p87 = por %p85, %p86
      %p88 = scmp.ne.s32.totalorder %s77, %s80
      %p89 = scmp.eq.s32.totalorder %s22, 1
      %p90 = por %p88, %p89
      %p91 = scmp.ne.s32.totalorder %s80, %s81
      %p92 = scmp.eq.s32.totalorder %s22, 0
      %p93 = por %p91, %p92
      %p94 = scmp.ne.s32.totalorder %s80, %s81
      %p95 = scmp.eq.s32.totalorder %s23, 1
      %p96 = por %p94, %p95
      %p98 = scmp.ne.s32.totalorder %s81, %s97
      %p99 = scmp.eq.s32.totalorder %s23, 0
      %p100 = por %p98, %p99
      %s101 = ssub.s32 %s24, %s36
      %p102 = scmp.eq.s32.totalorder %s101, 0
      %s104 = sadd.s32 %s103, 1
      %s105 = scalar_select %p102, %s103, %s104
      %p108 = pneg %p102
      %p109 = scmp.eq.s32.totalorder %s17, 1
      %p110 = por %p108, %p109
      %p111 = scmp.ne.s32.totalorder %s103, %s106
      %p112 = scmp.eq.s32.totalorder %s17, 0
      %p113 = por %p111, %p112
      %p114 = scmp.ne.s32.totalorder %s103, %s106
      %p115 = scmp.eq.s32.totalorder %s22, 1
      %p116 = por %p114, %p115
      %p117 = scmp.ne.s32.totalorder %s106, %s107
      %p118 = scmp.eq.s32.totalorder %s22, 0
      %p119 = por %p117, %p118
      %p120 = scmp.ne.s32.totalorder %s106, %s107
      %p121 = scmp.eq.s32.totalorder %s23, 1
      %p122 = por %p120, %p121
      %p124 = scmp.ne.s32.totalorder %s107, %s123
      %p125 = scmp.eq.s32.totalorder %s23, 0
      %p126 = por %p124, %p125
      %p127 = scmp.le.s32.totalorder 1, %s17
      %p128 = scmp.lt.s32.totalorder %s17, 3
      %p129 = pnand %p127, %p128
      %p130 = pneg %p129
      // Predicated region
      $region9: #{tpu_custom_call.1} parent=5 // pred_check
        _
      $region10: #{tpu_custom_call.1} parent=5 // pred_check_branch
        %132 = sbr.rel (%p129) target = $region12
      $region11: #{tpu_custom_call.1} parent=5 // pred_region
        %s133 = ssub.s32 %s17, 1
      $region12: #{tpu_custom_call.1} parent=5 // pred_fallthru
        _
      %p134 = scmp.lt.s32.totalorder %s17, 2
      // Predicated region
      $region13: #{tpu_custom_call.1} parent=5 // pred_check
        %p135 = pneg %p134
      $region14: #{tpu_custom_call.1} parent=5 // pred_check_branch
        %137 = sbr.rel (%p135) target = $region16
      $region15: #{tpu_custom_call.1} parent=5 // pred_region
        // Predicated region
        $region17: #{tpu_custom_call.1} parent=15 // pred_check
          %p138 = pneg %p55
        $region18: #{tpu_custom_call.1} parent=15 // pred_check_branch
          %140 = sbr.rel (%p138) target = $region20
        $region19: #{tpu_custom_call.1} parent=15 // pred_region
          %s141 = sand.u32 %s45, 1
          %s142 = scalar_lea.sflag [#allocation3], %s141
          %s143 = sand.u32 %s45, 1
          %s144 = smul.addr %s143, 16
          %s145 = scalar_lea.vmem [#allocation2], %s144
          %s146 = sadd.s32 %s24, %s25
          %p147 = scmp.lt.s32.totalorder %s146, 0
          %s148 = scalar_select %p147, %s146, 0
          %s149 = smul.u32 2, %s148
          %151 = vsyncadd %s142, 0
          %s152 = smul.addr %s149, 8
          %s153 = scalar_lea.hbm %s0, %s152
          %s154 = sshll.u32 %s153, 4
          %s155 = int_to_ptr.hbm [resolvable:$true] %s154
          %s156 = sshll.u32 %s145, 4
          %s157 = int_to_ptr.vmem [resolvable:$true] %s156
          %162 = dma.hbm_to_vmem [thread:$0]  %s155, 256, %s157, %s142, 128, 128, 8
        $region20: #{tpu_custom_call.1} parent=15 // pred_fallthru
          _
        // Predicated region
        $region21: #{tpu_custom_call.1} parent=15 // pred_check
          %p163 = pneg %p87
        $region22: #{tpu_custom_call.1} parent=15 // pred_check_branch
          %165 = sbr.rel (%p163) target = $region24
        $region23: #{tpu_custom_call.1} parent=15 // pred_region
          %s166 = sand.u32 %s77, 1
          %s167 = scalar_lea.sflag [#allocation6], %s166
          %s168 = sand.u32 %s77, 1
          %s169 = smul.addr %s168, 16
          %s170 = scalar_lea.vmem [#allocation5], %s169
          %s171 = sadd.s32 %s24, %s25
          %p172 = scmp.lt.s32.totalorder %s171, 0
          %s173 = scalar_select %p172, %s171, 0
          %s174 = smul.u32 2, %s173
          %176 = vsyncadd %s167, 0
          %s177 = smul.addr %s174, 8
          %s178 = scalar_lea.hbm %s1, %s177
          %s179 = sshll.u32 %s178, 4
          %s180 = int_to_ptr.hbm [resolvable:$true] %s179
          %s181 = sshll.u32 %s170, 4
          %s182 = int_to_ptr.vmem [resolvable:$true] %s181
          %187 = dma.hbm_to_vmem [thread:$0]  %s180, 256, %s182, %s167, 128, 128, 8
        $region24: #{tpu_custom_call.1} parent=15 // pred_fallthru
          _
      $region16: #{tpu_custom_call.1} parent=5 // pred_fallthru
        _
      %p188 = scmp.le.s32.totalorder 1, %s17
      %p189 = scmp.lt.s32.totalorder %s17, 3
      %p190 = pnand %p188, %p189
      %p191 = pneg %p190
      // Predicated region
      $region25: #{tpu_custom_call.1} parent=5 // pred_check
        _
      $region26: #{tpu_custom_call.1} parent=5 // pred_check_branch
        %193 = sbr.rel (%p190) target = $region28
      $region27: #{tpu_custom_call.1} parent=5 // pred_region
        %s194 = ssub.s32 %s17, 1
        %s195 = sand.u32 %s48, 1
        %s196 = scalar_lea.sflag [#allocation3], %s195
        %s197 = sand.u32 %s48, 1
        %s198 = smul.addr %s197, 16
        %s199 = scalar_lea.vmem [#allocation2], %s198
        // Predicated region
        $region29: #{tpu_custom_call.1} parent=27 // pred_check
          %p200 = pneg %p61
        $region30: #{tpu_custom_call.1} parent=27 // pred_check_branch
          %202 = sbr.rel (%p200) target = $region32
        $region31: #{tpu_custom_call.1} parent=27 // pred_region
          %204 = dma.done %s196, 256
        $region32: #{tpu_custom_call.1} parent=27 // pred_fallthru
          _
        %s205 = sand.u32 %s80, 1
        %s206 = scalar_lea.sflag [#allocation6], %s205
        %s207 = sand.u32 %s80, 1
        %s208 = smul.addr %s207, 16
        %s209 = scalar_lea.vmem [#allocation5], %s208
        // Predicated region
        $region33: #{tpu_custom_call.1} parent=27 // pred_check
          %p210 = pneg %p93
        $region34: #{tpu_custom_call.1} parent=27 // pred_check_branch
          %212 = sbr.rel (%p210) target = $region36
        $region35: #{tpu_custom_call.1} parent=27 // pred_region
          %214 = dma.done %s206, 256
        $region36: #{tpu_custom_call.1} parent=27 // pred_fallthru
          _
        %s215 = sand.u32 %s48, 1
        %s216 = scalar_lea.sflag [#allocation3], %s215
        %s217 = sand.u32 %s48, 1
        %s218 = smul.addr %s217, 16
        %s219 = scalar_lea.vmem [#allocation2], %s218
        %p220 = pneg %p61
        %p221 = pneg %p58
        %s222 = sand.u32 %s80, 1
        %s223 = scalar_lea.sflag [#allocation6], %s222
        %s224 = sand.u32 %s80, 1
        %s225 = smul.addr %s224, 16
        %s226 = scalar_lea.vmem [#allocation5], %s225
        %p227 = pneg %p93
        %p228 = pneg %p90
        %p229 = pneg %p119
        %p230 = pneg %p116
        %s231 = sand.u32 %s106, 1
        %s232 = scalar_lea.sflag [#allocation4], %s231
        %s233 = sand.u32 %s106, 1
        %s234 = smul.addr %s233, 8
        %s235 = scalar_lea.vmem [#allocation7], %s234
        %s236 = sadd.s32 %s26, %s27
        %p237 = scmp.lt.s32.totalorder %s236, 0
        %s238 = scalar_select %p237, %s236, 0
        %s239 = smul.u32 2, %s238
        %s240 = sadd.s32 %s26, %s27
        %p241 = scmp.lt.s32.totalorder %s240, 0
        %s242 = scalar_select %p241, %s240, 0
        %s243 = smul.u32 2, %s242
        %p244 = scmp.eq.s32.totalorder %s27, 0
        // Predicated region
        $region37: #{tpu_custom_call.1} parent=27 // pred_check
          %p245 = pneg %p244
        $region38: #{tpu_custom_call.1} parent=27 // pred_check_branch
          %247 = sbr.rel (%p245) target = $region40
        $region39: #{tpu_custom_call.1} parent=27 // pred_region
          %248 = vst [vmem:[%s235] sm:$0xff] 0.0
        $region40: #{tpu_custom_call.1} parent=27 // pred_fallthru
          _
        %v249 = vld [vmem:[%s199] sm:$0xff]
        %v250 = vld [vmem:[%s199 + $0x8] sm:$0xff]
        %v251 = vld [vmem:[%s209] sm:$0xff]
        %v252 = vld [vmem:[%s209 + $0x8] sm:$0xff]
        %v253 = vsub.f32 %v249, %v251
        %v254 = vsub.f32 %v250, %v252
        %v255 = vmul.f32 %v253, %v253
        %v256 = vmul.f32 %v254, %v254
        %v257 = vadd.f32 %v255, 1e-06
        %v258 = vadd.f32 %v256, 1e-06
        %v259 = vrsqrt.pop %v257
        %v260 = vmul.f32 %v259, %v257
        %v261 = vmul.f32 %v260, %v259
        %v262 = vmul.f32 0.5, %v261
        %v263 = vsub.f32 1.5, %v262
        %v264 = vmul.f32 %v259, %v263
        %v265 = vmul.f32 %v257, %v264
        %vm266 = vcmp.eq.f32.partialorder %v257, inf
        %v267 = vsel %vm266, %v257, %v265
        %vm268 = vcmp.eq.f32.partialorder %v257, 0.0
        %v269 = vand.u32 %v257, 2147483648
        %v270 = vsel %vm268, %v269, %v267
        %v271 = vrsqrt.pop %v258
        %v272 = vmul.f32 %v271, %v258
        %v273 = vmul.f32 %v272, %v271
        %v274 = vmul.f32 0.5, %v273
        %v275 = vsub.f32 1.5, %v274
        %v276 = vmul.f32 %v271, %v275
        %v277 = vmul.f32 %v258, %v276
        %vm278 = vcmp.eq.f32.partialorder %v258, inf
        %v279 = vsel %vm278, %v258, %v277
        %vm280 = vcmp.eq.f32.partialorder %v258, 0.0
        %v281 = vand.u32 %v258, 2147483648
        %v282 = vsel %vm280, %v281, %v279
        %s283 = sadd.s32 %s26, %s27
        %v284 = vlaneseq
        %v285 = vshrl.u32 %v284, 7
        %v286 = vadd.s32 %v285, 8
        %v287 = vlaneseq
        %v288 = vand.u32 %v287, 127
        %s289 = smul.u32 %s283, 16
        %v290 = vstv %s289
        %v291 = vadd.s32 %v290, %v285
        %v292 = vadd.s32 %v290, %v286
        %vm293 = vcmp.lt.s32.totalorder %v291, 16
        %vm294 = vcmp.lt.s32.totalorder %v292, 16
        %vm295 = vcmp.eq.s32.totalorder %v291, 16
        %vm296 = vcmp.eq.s32.totalorder %v292, 16
        %vm297 = vcmp.lt.s32.totalorder %v288, 0
        %vm298 = vmand %vm295, %vm297
        %vm299 = vmand %vm296, %vm297
        %vm300 = vmor %vm293, %vm298
        %vm301 = vmor %vm294, %vm299
        %v302 = vsel %vm300, %v270, 0.0
        %v303 = vsel %vm301, %v282, 0.0
        %v304 = vld [vmem:[%s235] sm:$0xff]
        %v305 = vadd.f32 %v302, %v303
        %v306 = vadd.f32 %v304, %v305
        %307 = vst [vmem:[%s235] sm:$0xff] %v306
        %s308 = sand.u32 %s106, 1
        %s309 = scalar_lea.sflag [#allocation4], %s308
        %s310 = sand.u32 %s106, 1
        %s311 = smul.addr %s310, 8
        %s312 = scalar_lea.vmem [#allocation7], %s311
        // Predicated region
        $region41: #{tpu_custom_call.1} parent=27 // pred_check
          %p313 = pneg %p116
        $region42: #{tpu_custom_call.1} parent=27 // pred_check_branch
          %315 = sbr.rel (%p313) target = $region44
        $region43: #{tpu_custom_call.1} parent=27 // pred_region
          %317 = vsyncadd %s309, 0
          %s318 = smul.addr %s26, 8
          %s319 = scalar_lea.hbm %s2, %s318
          %s321 = sshll.u32 %s312, 4
          %s322 = int_to_ptr.vmem [resolvable:$true] %s321
          %s323 = sshll.u32 %s319, 4
          %s324 = int_to_ptr.hbm [resolvable:$true] %s323
          %326 = dma.vmem_to_hbm [thread:$0]  %s322, 128, %s324, %s309
        $region44: #{tpu_custom_call.1} parent=27 // pred_fallthru
          _
      $region28: #{tpu_custom_call.1} parent=5 // pred_fallthru
        _
      %p327 = scmp.le.s32.totalorder 2, %s17
      // Predicated region
      $region45: #{tpu_custom_call.1} parent=5 // pred_check
        %p328 = pneg %p327
      $region46: #{tpu_custom_call.1} parent=5 // pred_check_branch
        %330 = sbr.rel (%p328) target = $region48
      $region47: #{tpu_custom_call.1} parent=5 // pred_region
        %s331 = ssub.s32 %s17, 2
        // Predicated region
        $region49: #{tpu_custom_call.1} parent=47 // pred_check
          %p332 = pneg %p122
        $region50: #{tpu_custom_call.1} parent=47 // pred_check_branch
          %334 = sbr.rel (%p332) target = $region52
        $region51: #{tpu_custom_call.1} parent=47 // pred_region
          %s335 = sand.u32 %s107, 1
          %s336 = scalar_lea.sflag [#allocation4], %s335
          %s337 = sand.u32 %s107, 1
          %s338 = smul.addr %s337, 8
          %s339 = scalar_lea.vmem [#allocation7], %s338
          %341 = dma.done %s336, 128
        $region52: #{tpu_custom_call.1} parent=47 // pred_fallthru
          _
      $region48: #{tpu_custom_call.1} parent=5 // pred_fallthru
        _
    $region6: #{tpu_custom_call.1} parent=1 // loop_footer
      %s21 = sadd.s32 1, %s17
    $region7: #{tpu_custom_call.1} parent=1 // loop_footer_branch
      %16 = sbr.rel target = $region3
    $region8: #{tpu_custom_call.1} parent=1 // loop_exit
      _
    %342 = vsyncpa [#allocation3], 1
    %s343 = scalar_lea.sflag [#allocation3], 1
    %344 = vsyncpa %s343, 1
    %345 = vsyncpa [#allocation6], 1
    %s346 = scalar_lea.sflag [#allocation6], 1
    %347 = vsyncpa %s346, 1
    %348 = vsyncpa [#allocation4], 1
    %s349 = scalar_lea.sflag [#allocation4], 1
    %350 = vsyncpa %s349, 1

</llo_original>
